<compile_context>
chip_gen: v6e
topology: v6e:2x2x1
jax: 0.10.0
libtpu: 0.0.40
codegen_flags: <defaults>
</compile_context>

<pallas_src>
import functools
import math

import jax
import jax.numpy as jnp
from jax import lax
from jax.experimental import pallas as pl
from jax.experimental.pallas import tpu as pltpu

BN_EPS = 1e-5
LANE = 128
SUBLANE = 8


def _round_up(x, m):
    return ((x + m - 1) // m) * m


def _vmem_limit_bytes():
    """Explicit VMEM limit for CompilerParams (and the tile-size budget)."""
    cap = 64 * 1024 * 1024                       # safe floor: v7x physical VMEM
    try:
        cap = int(getattr(pltpu.get_tpu_info(), "vmem_capacity_bytes", cap))
    except Exception:
        pass
    return min(int(cap * 0.85), 110 * 1024 * 1024)


def _spec(shape, index_map, single_buffer=False):
    """BlockSpec helper; grid-invariant operands request a single pipeline
    buffer (saves a whole duplicate copy of the weights in VMEM).  Feature
    detected so older jax versions silently fall back to the default."""
    if single_buffer:
        try:
            return pl.BlockSpec(shape, index_map, pipeline_mode=pl.Buffered(1))
        except (TypeError, AttributeError):
            pass
    return pl.BlockSpec(shape, index_map)


# ----------------------------------------------------------------------------
# Pallas kernels
# ----------------------------------------------------------------------------
def _max_unpool2x2_kernel(x_ref, idx_ref, o_ref, *, wout):
    """x_ref/idx_ref: (1, TH, Win, C) pooled row tile; o_ref: (1, TH, 2, Win, 2*C).

    o_ref[0, ih, dh, iw, dw*C + c] holds the value destined for output pixel
    (2*ih+dh, 2*iw+dw), channel c: a contiguous reshape in the wrapper yields
    the (2*Hin, 2*Win, C) unpooled image.  dw halves are stored as two aligned
    lane slices (no lane-axis concatenate)."""
    _, TH, Win, C = x_ref.shape
    t = pl.program_id(1)
    x = x_ref[0].astype(o_ref.dtype)
    idx = idx_ref[0]
    ih = lax.broadcasted_iota(jnp.int32, (TH, Win, C), 0) + t * TH
    iw = lax.broadcasted_iota(jnp.int32, (TH, Win, C), 1)
    # offset of the selected pixel inside its own 2x2 window: dh*wout + dw
    local = idx - (2 * ih * wout + 2 * iw)
    zero = jnp.zeros_like(x)
    for dh in range(2):
        for dw in range(2):
            o_ref[0, :, dh, :, pl.ds(dw * C, C)] = jnp.where(
                local == dh * wout + dw, x, zero)


def _conv3x3_bn_relu_kernel(x_ref, top_ref, bot_ref, w_ref, scale_ref, shift_ref,
                            o_ref, *, h_real, mask_rows):
    """One (TH, W) output row-tile of 3x3 conv (pad=1) + folded BN + ReLU.

    x_ref:   (1, TH, W+2, Cinp)  current row tile, W borders already zero
    top_ref: (1, 8,  W+2, Cinp)  8-row slab containing the row just above the tile
    bot_ref: (1, 8,  W+2, Cinp)  8-row slab containing the row just below the tile
    w_ref:   (3, 3*Cinp, Coutp)  bf16 weights; contraction index = kh*Cinp + cin
    scale_ref/shift_ref: (1, Coutp) f32 folded BatchNorm affine (+ conv bias)
    o_ref:   (1, TH, W+2, Coutp) W-padded output row tile (borders written as 0)
    """
    _, TH, Wp2, Coutp = o_ref.shape
    W = Wp2 - 2
    Cinp = x_ref.shape[-1]
    t = pl.program_id(1)
    last = pl.num_programs(1) - 1

    # H halo: row above / below the tile, zeroed at the image boundary.
    top = top_ref[0, 7:8, :, :]                      # global row t*TH - 1
    bot = bot_ref[0, 0:1, :, :]                      # global row t*TH + TH
    top = jnp.where(t == 0, jnp.zeros_like(top), top)
    bot = jnp.where(t == last, jnp.zeros_like(bot), bot)
    slab = jnp.concatenate([top, x_ref[0], bot], axis=0)   # (TH+2, W+2, Cinp)

    # Tap-merged conv: one matmul per kw with K = 3*Cinp (kh folded into K).
    acc = jnp.zeros((TH * W, Coutp), jnp.float32)
    for kw in range(3):
        sub = slab[:, kw:kw + W, :]                  # (TH+2, W, Cinp); kw=1,2 unaligned (once per tile)
        patch = jnp.concatenate([sub[kh:kh + TH] for kh in range(3)], axis=-1)
        acc = acc + jnp.dot(patch.reshape(TH * W, 3 * Cinp), w_ref[kw],
                            preferred_element_type=jnp.float32)

    y = jnp.maximum(acc * scale_ref[...] + shift_ref[...], 0.0)
    y = y.reshape(TH, W, Coutp)
    if mask_rows:
        # Rows >= h_real are alignment padding: force them to exact zero so the
        # next layer's halo reads match true zero padding.
        rows = lax.broadcasted_iota(jnp.int32, (TH, W, Coutp), 0) + t * TH
        y = jnp.where(rows < h_real, y, 0.0)

    o_ref[0, :, pl.ds(1, W), :] = y.astype(o_ref.dtype)
    zcol = jnp.zeros((TH, 1, Coutp), o_ref.dtype)
    o_ref[0, :, pl.ds(0, 1), :] = zcol
    o_ref[0, :, pl.ds(W + 1, 1), :] = zcol


# ----------------------------------------------------------------------------
# Wrappers
# ----------------------------------------------------------------------------
def _unpool2x2_pallas(x_nhwc, idx_nhwc, wout, out_dtype=jnp.bfloat16):
    """2x2 max-unpool, packed output layout (N, Hin, 2, Win, 2C)."""
    N, Hin, Win, C = x_nhwc.shape
    # Row tile so the (x, idx, out) blocks stay small in VMEM even for large images.
    per_row = 2 * Win * C * (2 + 4 + 8)           # (bf16 x + i32 idx + bf16 out) * 2 bufs
    cap = max(1, (4 << 20) // per_row)
    THu = min(Hin, cap)
    while Hin % THu:
        THu -= 1

    kern = functools.partial(_max_unpool2x2_kernel, wout=wout)
    return pl.pallas_call(
        kern,
        out_shape=jax.ShapeDtypeStruct((N, Hin, 2, Win, 2 * C), out_dtype),
        grid_spec=pltpu.PrefetchScalarGridSpec(
            num_scalar_prefetch=0,
            grid=(N, Hin // THu),
            in_specs=[
                pl.BlockSpec((1, THu, Win, C), lambda n, t: (n, t, 0, 0)),
                pl.BlockSpec((1, THu, Win, C), lambda n, t: (n, t, 0, 0)),
            ],
            out_specs=pl.BlockSpec((1, THu, 2, Win, 2 * C),
                                   lambda n, t: (n, t, 0, 0, 0)),
        ),
        compiler_params=pltpu.CompilerParams(
            dimension_semantics=("parallel", "parallel"),
            vmem_limit_bytes=_vmem_limit_bytes()),
    )(x_nhwc, idx_nhwc)


def _pick_conv_tile(H, W, Cinp, Coutp, out_bytes, vmem_limit):
    """Row tile TH (multiple of 8) sized from the per-tile VMEM footprint."""
    fixed = (2 * 9 * Cinp * Coutp * 2                 # weights (2 bufs, bf16)
             + 4 * SUBLANE * (W + 2) * Cinp * 2       # two 8-row halo slabs (2 bufs)
             + (4 << 20))                             # margin
    per_row = ((W + 2) * Cinp * 2 * 3                 # input tile (2 bufs) + slab
               + W * Cinp * 2 * 8                     # kw-sub + 3*Cin patch temporaries
               + W * Coutp * 4 * 2                    # f32 accumulator + activation temp
               + (W + 2) * Coutp * out_bytes * 2)     # output tile (2 bufs)
    budget = max(vmem_limit - fixed, per_row * SUBLANE)
    cap = max(SUBLANE, (budget // per_row) // SUBLANE * SUBLANE)
    cap = min(cap, _round_up(H, SUBLANE))
    best_th, best_waste = SUBLANE, None
    th = SUBLANE
    while th <= cap:                                  # minimise H padding waste
        waste = _round_up(H, th) - H
        if best_waste is None or waste <= best_waste:
            best_th, best_waste = th, waste
        th += SUBLANE
    return best_th


def _conv_bn_relu_pallas(h_pad, w3, scale, shift, h_real, out_dtype, tile_h):
    """3x3 conv (pad 1) + folded-BN + ReLU on a W-padded NHWC activation.

    h_pad: (N, Hpad, W+2, Cinp) bf16, zero border columns, zero rows >= h_real.
    w3:    (3, 3*Cinp, Coutp) bf16;  scale/shift: (1, Coutp) f32.
    Returns (N, Hpad, W+2, Coutp) in `out_dtype`, same padded layout.
    """
    N, Hpad, Wp2, Cinp = h_pad.shape
    Coutp = w3.shape[-1]
    TH = tile_h
    assert Hpad % TH == 0 and TH % SUBLANE == 0
    nt = Hpad // TH
    nb = TH // SUBLANE
    hblocks = Hpad // SUBLANE

    def x_map(n, t):
        return (n, t, 0, 0)

    def top_map(n, t):                               # 8-row block holding row t*TH - 1
        return (n, jnp.maximum(t * nb - 1, 0), 0, 0)

    def bot_map(n, t):                               # 8-row block holding row t*TH + TH
        return (n, jnp.minimum((t + 1) * nb, hblocks - 1), 0, 0)

    kern = functools.partial(_conv3x3_bn_relu_kernel, h_real=h_real,
                             mask_rows=(Hpad != h_real))
    return pl.pallas_call(
        kern,
        out_shape=jax.ShapeDtypeStruct((N, Hpad, Wp2, Coutp), out_dtype),
        grid_spec=pltpu.PrefetchScalarGridSpec(
            num_scalar_prefetch=0,
            grid=(N, nt),
            in_specs=[
                pl.BlockSpec((1, TH, Wp2, Cinp), x_map),
                pl.BlockSpec((1, SUBLANE, Wp2, Cinp), top_map),
                pl.BlockSpec((1, SUBLANE, Wp2, Cinp), bot_map),
                _spec((3, 3 * Cinp, Coutp), lambda n, t: (0, 0, 0), single_buffer=True),
                _spec((1, Coutp), lambda n, t: (0, 0), single_buffer=True),
                _spec((1, Coutp), lambda n, t: (0, 0), single_buffer=True),
            ],
            out_specs=pl.BlockSpec((1, TH, Wp2, Coutp), lambda n, t: (n, t, 0, 0)),
        ),
        compiler_params=pltpu.CompilerParams(
            dimension_semantics=("parallel", "parallel"),
            vmem_limit_bytes=_vmem_limit_bytes()),
    )(h_pad, h_pad, h_pad, w3, scale, shift)


def decoder_forward(x_nchw, indices_nchw, size, layer_params):
    """Pallas implementation of _Decoder.forward (inference-mode BatchNorm).

    x_nchw, indices_nchw: (N, Cin, Hin, Win);  size: (N, Cin, Hout, Wout).
    layer_params: list of (W, b, gamma, beta, running_mean, running_var).
    Returns NCHW output (N, Cout, Hout, Wout) float32.
    """
    N, Cin, Hin, Win = x_nchw.shape
    Hout, Wout = int(size[2]), int(size[3])

    # NCHW -> NHWC, cast activations to bf16 (halves unpool HBM traffic), pad
    # channels once to a multiple of 128 (lane-dense everywhere after this).
    x = jnp.transpose(x_nchw, (0, 2, 3, 1)).astype(jnp.bfloat16)
    idx = jnp.transpose(indices_nchw, (0, 2, 3, 1)).astype(jnp.int32)
    Cp = _round_up(Cin, LANE)
    if Cp != Cin:
        x = jnp.pad(x, ((0, 0), (0, 0), (0, 0), (0, Cp - Cin)))
        idx = jnp.pad(idx, ((0, 0), (0, 0), (0, 0), (0, Cp - Cin)))

    u_packed = _unpool2x2_pallas(x, idx, Wout)       # (N, Hin, 2, Win, 2*Cp) bf16
    u = u_packed.reshape(N, 2 * Hin, 2 * Win, Cp)

    # Single row-tile size shared by all conv layers (sized for the widest one).
    Cmax = max([Cp] + [_round_up(p[0].shape[0], LANE) for p in layer_params])
    TH = _pick_conv_tile(Hout, Wout, Cmax, Cmax, 4, _vmem_limit_bytes())
    Hpad = _round_up(Hout, TH)

    # One fused XLA pass: un-pack relayout + zero W borders + H alignment rows.
    # TODO(synk): fuse the unpool into the first conv to remove this handoff too.
    u = jnp.pad(u, ((0, 0), (0, Hpad - 2 * Hin), (1, 1 + (Wout - 2 * Win)), (0, 0)))

    h = u
    n_layers = len(layer_params)
    for li, (Wc, b, gamma, beta, mean, var) in enumerate(layer_params):
        cout, cin = Wc.shape[0], Wc.shape[1]
        cinp, coutp = _round_up(cin, LANE), _round_up(cout, LANE)
        assert h.shape[-1] == cinp

        # Fold conv bias + eval-mode BN into per-channel scale/shift.
        scale = gamma / jnp.sqrt(var + BN_EPS)
        shift = beta + (b - mean) * scale
        scale_p = jnp.pad(scale, (0, coutp - cout)).reshape(1, -1).astype(jnp.float32)
        shift_p = jnp.pad(shift, (0, coutp - cout)).reshape(1, -1).astype(jnp.float32)

        # (Cout, Cin, kh, kw) -> (kw, kh, Cin, Cout) -> (3, 3*Cinp, Coutp) bf16.
        wt = jnp.transpose(Wc, (3, 2, 1, 0))
        wt = jnp.pad(wt, ((0, 0), (0, 0), (0, cinp - cin), (0, coutp - cout)))
        wt = wt.reshape(3, 3 * cinp, coutp).astype(jnp.bfloat16)

        out_dtype = jnp.float32 if li == n_layers - 1 else jnp.bfloat16
        h = _conv_bn_relu_pallas(h, wt, scale_p, shift_p, Hout, out_dtype, TH)

    cout_last = layer_params[-1][0].shape[0]
    out = h[:, :Hout, 1:1 + Wout, :cout_last]        # drop W borders / H pad / C pad
    return jnp.transpose(out, (0, 3, 1, 2)).astype(jnp.float32)


# ----------------------------------------------------------------------------
# Pure-JAX reference (for correctness check)
# ----------------------------------------------------------------------------
def decoder_reference(x_nchw, indices_nchw, size, layer_params):
    N, C, Hin, Win = x_nchw.shape
    Hout, Wout = int(size[2]), int(size[3])
    up = jnp.zeros((N, C, Hout * Wout), x_nchw.dtype)
    n_i = jnp.arange(N)[:, None, None, None]
    c_i = jnp.arange(C)[None, :, None, None]
    up = up.at[n_i, c_i, indices_nchw].set(x_nchw)
    h = up.reshape(N, C, Hout, Wout)
    for (W, b, gamma, beta, mean, var) in layer_params:
        y = lax.conv_general_dilated(
            h, W, (1, 1), ((1, 1), (1, 1)),
            dimension_numbers=("NCHW", "OIHW", "NCHW"),
            precision=lax.Precision.HIGHEST,
        ) + b[None, :, None, None]
        y = (y - mean[None, :, None, None]) / jnp.sqrt(var[None, :, None, None] + BN_EPS)
        y = y * gamma[None, :, None, None] + beta[None, :, None, None]
        h = jnp.maximum(y, 0.0)
    return h


# ----------------------------------------------------------------------------
# Main
# ----------------------------------------------------------------------------
if __name__ == "__main__":
    # Small shapes: n_in_feat=4, n_out_feat=8, n_blocks=2
    N, n_in, n_out = 2, 4, 8
    Hin = Win = 8
    Hout, Wout = 2 * Hin, 2 * Win
    size = (N, n_in, Hout, Wout)

    key = jax.random.PRNGKey(0)

    channels = [n_in, n_in, n_out]
    layer_params = []
    for i in range(2):
        cin, cout = channels[i], channels[i + 1]
        key, k1, k2, k3, k4, k5, k6 = jax.random.split(key, 7)
        Wc = jax.random.normal(k1, (cout, cin, 3, 3), jnp.float32) / (3.0 * math.sqrt(cin))
        bc = jax.random.normal(k2, (cout,), jnp.float32) * 0.05
        gamma = jax.random.uniform(k3, (cout,), jnp.float32, 0.5, 1.5)
        beta = jax.random.normal(k4, (cout,), jnp.float32) * 0.1
        mean = jax.random.normal(k5, (cout,), jnp.float32) * 0.1
        var = jax.random.uniform(k6, (cout,), jnp.float32, 0.5, 1.5)
        layer_params.append((Wc, bc, gamma, beta, mean, var))

    # Deterministic inputs: x and max-pool-style indices (one pick per 2x2 window).
    key, ka, kb, kx = jax.random.split(key, 4)
    dh = jax.random.bernoulli(ka, 0.5, (N, n_in, Hin, Win)).astype(jnp.int32)
    dw = jax.random.bernoulli(kb, 0.5, (N, n_in, Hin, Win)).astype(jnp.int32)
    ih = jnp.arange(Hin, dtype=jnp.int32)[None, None, :, None]
    iw = jnp.arange(Win, dtype=jnp.int32)[None, None, None, :]
    indices = (2 * ih + dh) * Wout + (2 * iw + dw)               # (N, Cin, Hin, Win) int32
    x = jax.random.normal(kx, (N, n_in, Hin, Win), jnp.float32)  # NCHW, like PyTorch

    out = decoder_forward(x, indices, size, layer_params)
    out = jax.block_until_ready(out)

    ref = jax.block_until_ready(decoder_reference(x, indices, size, layer_params))

    assert out.shape == (N, n_out, Hout, Wout), out.shape
    # bf16 matmul operands with f32 accumulation -> widened tolerance; structural
    # bugs would produce O(1) errors, far above this threshold.
    assert bool(jnp.allclose(out, ref, atol=5e-2, rtol=5e-2)), (
        "max abs diff = %e" % float(jnp.max(jnp.abs(out - ref)))
    )

    print("KERNEL_OK")
</pallas_src>

<mosaic_0001>
module attributes {stable_mosaic.version = 11 : i64} {
  func.func @_max_unpool2x2_kernel(%arg0: i32, %arg1: i32, %arg2: memref<1x8x8x128xbf16, #tpu.memory_space<vmem>>, %arg3: memref<1x8x8x128xi32, #tpu.memory_space<vmem>>, %arg4: memref<1x8x2x8x256xbf16, #tpu.memory_space<vmem>>) attributes {dimension_semantics = [#tpu.dimension_semantics<parallel>, #tpu.dimension_semantics<parallel>], iteration_bounds = array<i64: 2, 1>, scalar_prefetch = 0 : i64, scratch_operands = 0 : i64, tpu.core_type = #tpu.core_type<tc>, window_params = [{transform_indices = @transform_0, window_bounds = array<i64: 1, 8, 8, 128>}, {transform_indices = @transform_1, window_bounds = array<i64: 1, 8, 8, 128>}, {transform_indices = @transform_2, window_bounds = array<i64: 1, 8, 2, 8, 256>}]} {
    %c0 = arith.constant 0 : index
    %c0_0 = arith.constant 0 : index
    %c0_1 = arith.constant 0 : index
    %c0_2 = arith.constant 0 : index
    %0 = vector.load %arg2[%c0, %c0_0, %c0_1, %c0_2] : memref<1x8x8x128xbf16, #tpu.memory_space<vmem>>, vector<1x8x8x128xbf16>
    %1 = vector.shape_cast %0 : vector<1x8x8x128xbf16> to vector<8x8x128xbf16>
    %c0_3 = arith.constant 0 : index
    %c0_4 = arith.constant 0 : index
    %c0_5 = arith.constant 0 : index
    %c0_6 = arith.constant 0 : index
    %2 = vector.load %arg3[%c0_3, %c0_4, %c0_5, %c0_6] : memref<1x8x8x128xi32, #tpu.memory_space<vmem>>, vector<1x8x8x128xi32>
    %3 = vector.shape_cast %2 : vector<1x8x8x128xi32> to vector<8x8x128xi32>
    %4 = tpu.iota {dimensions = array<i32: 0>} : vector<8x8x128xi32>
    %c8_i32 = arith.constant 8 : i32
    %5 = arith.muli %arg1, %c8_i32 : i32
    %6 = vector.broadcast %5 : i32 to vector<8x8x128xi32>
    %7 = arith.addi %4, %6 : vector<8x8x128xi32>
    %8 = tpu.iota {dimensions = array<i32: 1>} : vector<8x8x128xi32>
    %c2_i32 = arith.constant 2 : i32
    %9 = vector.broadcast %c2_i32 : i32 to vector<8x8x128xi32>
    %10 = arith.muli %9, %7 : vector<8x8x128xi32>
    %c16_i32 = arith.constant 16 : i32
    %11 = vector.broadcast %c16_i32 : i32 to vector<8x8x128xi32>
    %12 = arith.muli %10, %11 : vector<8x8x128xi32>
    %c2_i32_7 = arith.constant 2 : i32
    %13 = vector.broadcast %c2_i32_7 : i32 to vector<8x8x128xi32>
    %14 = arith.muli %13, %8 : vector<8x8x128xi32>
    %15 = arith.addi %12, %14 : vector<8x8x128xi32>
    %16 = arith.subi %3, %15 : vector<8x8x128xi32>
    %cst = arith.constant 0.000000e+00 : bf16
    %17 = vector.broadcast %cst : bf16 to vector<8x8x128xbf16>
    %c0_i32 = arith.constant 0 : i32
    %18 = vector.broadcast %c0_i32 : i32 to vector<8x8x128xi32>
    %19 = arith.cmpi eq, %16, %18 : vector<8x8x128xi32>
    %20 = arith.select %19, %1, %17 : vector<8x8x128xi1>, vector<8x8x128xbf16>
    %c0_8 = arith.constant 0 : index
    %c0_9 = arith.constant 0 : index
    %c0_10 = arith.constant 0 : index
    %c0_11 = arith.constant 0 : index
    %c0_12 = arith.constant 0 : index
    %21 = vector.load %arg4[%c0_8, %c0_9, %c0_10, %c0_11, %c0_12] : memref<1x8x2x8x256xbf16, #tpu.memory_space<vmem>>, vector<1x8x1x8x128xbf16>
    %22 = vector.shape_cast %21 : vector<1x8x1x8x128xbf16> to vector<8x8x128xbf16>
    %23 = vector.shape_cast %20 : vector<8x8x128xbf16> to vector<1x8x1x8x128xbf16>
    tpu.vector_store %arg4[%c0_8, %c0_9, %c0_10, %c0_11, %c0_12], %23 {strides = array<i32>} : memref<1x8x2x8x256xbf16, #tpu.memory_space<vmem>>, vector<1x8x1x8x128xbf16>,
    %c1_i32 = arith.constant 1 : i32
    %24 = vector.broadcast %c1_i32 : i32 to vector<8x8x128xi32>
    %25 = arith.cmpi eq, %16, %24 : vector<8x8x128xi32>
    %26 = arith.select %25, %1, %17 : vector<8x8x128xi1>, vector<8x8x128xbf16>
    %c0_13 = arith.constant 0 : index
    %c0_14 = arith.constant 0 : index
    %c0_15 = arith.constant 0 : index
    %c0_16 = arith.constant 0 : index
    %c128 = arith.constant 128 : index
    %27 = vector.load %arg4[%c0_13, %c0_14, %c0_15, %c0_16, %c128] : memref<1x8x2x8x256xbf16, #tpu.memory_space<vmem>>, vector<1x8x1x8x128xbf16>
    %28 = vector.shape_cast %27 : vector<1x8x1x8x128xbf16> to vector<8x8x128xbf16>
    %29 = vector.shape_cast %26 : vector<8x8x128xbf16> to vector<1x8x1x8x128xbf16>
    tpu.vector_store %arg4[%c0_13, %c0_14, %c0_15, %c0_16, %c128], %29 {strides = array<i32>} : memref<1x8x2x8x256xbf16, #tpu.memory_space<vmem>>, vector<1x8x1x8x128xbf16>,
    %c16_i32_17 = arith.constant 16 : i32
    %30 = vector.broadcast %c16_i32_17 : i32 to vector<8x8x128xi32>
    %31 = arith.cmpi eq, %16, %30 : vector<8x8x128xi32>
    %32 = arith.select %31, %1, %17 : vector<8x8x128xi1>, vector<8x8x128xbf16>
    %c0_18 = arith.constant 0 : index
    %c0_19 = arith.constant 0 : index
    %c1 = arith.constant 1 : index
    %c0_20 = arith.constant 0 : index
    %c0_21 = arith.constant 0 : index
    %33 = vector.load %arg4[%c0_18, %c0_19, %c1, %c0_20, %c0_21] : memref<1x8x2x8x256xbf16, #tpu.memory_space<vmem>>, vector<1x8x1x8x128xbf16>
    %34 = vector.shape_cast %33 : vector<1x8x1x8x128xbf16> to vector<8x8x128xbf16>
    %35 = vector.shape_cast %32 : vector<8x8x128xbf16> to vector<1x8x1x8x128xbf16>
    tpu.vector_store %arg4[%c0_18, %c0_19, %c1, %c0_20, %c0_21], %35 {strides = array<i32>} : memref<1x8x2x8x256xbf16, #tpu.memory_space<vmem>>, vector<1x8x1x8x128xbf16>,
    %c17_i32 = arith.constant 17 : i32
    %36 = vector.broadcast %c17_i32 : i32 to vector<8x8x128xi32>
    %37 = arith.cmpi eq, %16, %36 : vector<8x8x128xi32>
    %38 = arith.select %37, %1, %17 : vector<8x8x128xi1>, vector<8x8x128xbf16>
    %c0_22 = arith.constant 0 : index
    %c0_23 = arith.constant 0 : index
    %c1_24 = arith.constant 1 : index
    %c0_25 = arith.constant 0 : index
    %c128_26 = arith.constant 128 : index
    %39 = vector.load %arg4[%c0_22, %c0_23, %c1_24, %c0_25, %c128_26] : memref<1x8x2x8x256xbf16, #tpu.memory_space<vmem>>, vector<1x8x1x8x128xbf16>
    %40 = vector.shape_cast %39 : vector<1x8x1x8x128xbf16> to vector<8x8x128xbf16>
    %41 = vector.shape_cast %38 : vector<8x8x128xbf16> to vector<1x8x1x8x128xbf16>
    tpu.vector_store %arg4[%c0_22, %c0_23, %c1_24, %c0_25, %c128_26], %41 {strides = array<i32>} : memref<1x8x2x8x256xbf16, #tpu.memory_space<vmem>>, vector<1x8x1x8x128xbf16>,
    return
  }
  func.func @transform_0(%arg0: i32, %arg1: i32) -> (i32, i32, i32, i32) {
    %c0_i32 = arith.constant 0 : i32
    %c0_i32_0 = arith.constant 0 : i32
    %c0_i32_1 = arith.constant 0 : i32
    return %arg0, %arg1, %c0_i32, %c0_i32_0 : i32, i32, i32, i32
  }
  func.func @transform_1(%arg0: i32, %arg1: i32) -> (i32, i32, i32, i32) {
    %c0_i32 = arith.constant 0 : i32
    %c0_i32_0 = arith.constant 0 : i32
    %c0_i32_1 = arith.constant 0 : i32
    return %arg0, %arg1, %c0_i32, %c0_i32_0 : i32, i32, i32, i32
  }
  func.func @transform_2(%arg0: i32, %arg1: i32) -> (i32, i32, i32, i32, i32) {
    %c0_i32 = arith.constant 0 : i32
    %c0_i32_0 = arith.constant 0 : i32
    %c0_i32_1 = arith.constant 0 : i32
    %c0_i32_2 = arith.constant 0 : i32
    return %arg0, %arg1, %c0_i32, %c0_i32_0, %c0_i32_1 : i32, i32, i32, i32, i32
  }
}

</mosaic_0001>

<llo_original>
// kernel: tpu_custom_call.1
$region0: #{tpu_custom_call.1}
  #allocation0 [shape = 'u32[]', space=smem, size = 0x4, offset = 0x4, fixed_abs, tag = 'smem constant byte address 0x4 - core index']
  #allocation1 [shape = 'u32[144,128]{1,0:T(1,128)}', space=vmem, size = 0x12000, scoped, tag = 'internal scratch']
  %s0 = inlined_call_operand.hbm [shape: bf16[2,8,8,128], index: 0, kind: input, shape index: {}]
  %s1 = inlined_call_operand.hbm [shape: s32[2,8,8,128], index: 1, kind: input, shape index: {}]
  %s2 = inlined_call_operand.hbm [shape: bf16[2,8,2,8,256], index: 2, kind: output, shape index: {}]
  %s3 = sld [smem:[#allocation0]]
  $region49: #{tpu_custom_call.1} parent=0
    _
  %s5 = ssub.s32 1, %s3
  %s6 = scalar_select 0, %s5, %s3
  $region1: #{tpu_custom_call.1} parent=0
    #allocation2 [shape = 'u8[32768]{0}', space=vmem, size = 0x8000, scoped, tag = 'input window, operand 0']
    #allocation3 [shape = 's32[2]{0}', space=sflag, size = 0x8, scoped, tag = 'scoped memory for tpu_custom_call.1']
    #allocation4 [shape = 's32[2]{0}', space=sflag, size = 0x8, scoped, tag = 'scoped memory for tpu_custom_call.1']
    #allocation5 [shape = 'u8[65536]{0}', space=vmem, size = 0x10000, scoped, tag = 'input window, operand 1']
    #allocation6 [shape = 's32[2]{0}', space=sflag, size = 0x8, scoped, tag = 'scoped memory for tpu_custom_call.1']
    #allocation7 [shape = 'u8[131072]{0}', space=vmem, size = 0x20000, scoped, tag = 'output window, operand 0']
    %7 = vsyncpa [#allocation3], 0
    %s8 = scalar_lea.sflag [#allocation3], 1
    %9 = vsyncpa %s8, 0
    %10 = vsyncpa [#allocation6], 0
    %s11 = scalar_lea.sflag [#allocation6], 1
    %12 = vsyncpa %s11, 0
    %13 = vsyncpa [#allocation4], 0
    %s14 = scalar_lea.sflag [#allocation4], 1
    %15 = vsyncpa %s14, 0
    loop: start=0, step=1, limit=4
    $region2: #{tpu_custom_call.1} parent=1 // loop_pre_header
      _
    $region3: #{tpu_custom_call.1} parent=1 // loop_header
      %s17 = sphi 0, %s21
      %p18 = scmp.ge.s32.totalorder %s17, 4
      %s24 = sphi 0, %s36
      %s25 = sphi 0, %s32
      %s26 = sphi 0, %s24
      %s27 = sphi 0, %s25
      %s28 = sphi 0, %s26
      %s29 = sphi 0, %s27
      %s41 = sphi 0, %s43
      %s44 = sphi 0, %s41
      %s45 = sphi 0, %s44
      %s61 = sphi 0, %s45
      %s69 = sphi 0, %s71
      %s72 = sphi 0, %s69
      %s73 = sphi 0, %s72
      %s89 = sphi 0, %s73
      %s97 = sphi 0, %s99
      %s100 = sphi 0, %s97
      %s101 = sphi 0, %s100
      %s117 = sphi 0, %s101
    $region4: #{tpu_custom_call.1} parent=1 // loop_header_branch
      %20 = sbr.rel (%p18) target = $region8
    $region5: #{tpu_custom_call.1} parent=1 // loop_body
      %s22 = ssub.s32 %s17, 1
      %s23 = ssub.s32 %s17, 2
      %s30 = sadd.s32 1, %s25
      %p31 = scmp.ge.s32.totalorder %s30, 1
      %s32 = scalar_select %p31, 0, %s30
      %s33 = sadd.s32 1, %s24
      %s34 = scalar_select %p31, %s33, %s24
      %p35 = scmp.ge.s32.totalorder %s34, 2
      %s36 = scalar_select %p35, 0, %s34
      %s37 = ssub.s32 %s24, %s36
      %s38 = ssub.s32 %s25, %s32
      %s39 = sor.u32 %s37, %s38
      %p40 = scmp.eq.s32.totalorder %s39, 0
      %s42 = sadd.s32 %s41, 1
      %s43 = scalar_select %p40, %s41, %s42
      %p46 = pneg %p40
      %p47 = scmp.eq.s32.totalorder %s17, 1
      %p48 = por %p46, %p47
      %p49 = scmp.ne.s32.totalorder %s41, %s44
      %p50 = scmp.eq.s32.totalorder %s17, 0
      %p51 = por %p49, %p50
      %p52 = scmp.ne.s32.totalorder %s41, %s44
      %p53 = scmp.eq.s32.totalorder %s22, 1
      %p54 = por %p52, %p53
      %p55 = scmp.ne.s32.totalorder %s44, %s45
      %p56 = scmp.eq.s32.totalorder %s22, 0
      %p57 = por %p55, %p56
      %p58 = scmp.ne.s32.totalorder %s44, %s45
      %p59 = scmp.eq.s32.totalorder %s23, 1
      %p60 = por %p58, %p59
      %p62 = scmp.ne.s32.totalorder %s45, %s61
      %p63 = scmp.eq.s32.totalorder %s23, 0
      %p64 = por %p62, %p63
      %s65 = ssub.s32 %s24, %s36
      %s66 = ssub.s32 %s25, %s32
      %s67 = sor.u32 %s65, %s66
      %p68 = scmp.eq.s32.totalorder %s67, 0
      %s70 = sadd.s32 %s69, 1
      %s71 = scalar_select %p68, %s69, %s70
      %p74 = pneg %p68
      %p75 = scmp.eq.s32.totalorder %s17, 1
      %p76 = por %p74, %p75
      %p77 = scmp.ne.s32.totalorder %s69, %s72
      %p78 = scmp.eq.s32.totalorder %s17, 0
      %p79 = por %p77, %p78
      %p80 = scmp.ne.s32.totalorder %s69, %s72
      %p81 = scmp.eq.s32.totalorder %s22, 1
      %p82 = por %p80, %p81
      %p83 = scmp.ne.s32.totalorder %s72, %s73
      %p84 = scmp.eq.s32.totalorder %s22, 0
      %p85 = por %p83, %p84
      %p86 = scmp.ne.s32.totalorder %s72, %s73
      %p87 = scmp.eq.s32.totalorder %s23, 1
      %p88 = por %p86, %p87
      %p90 = scmp.ne.s32.totalorder %s73, %s89
      %p91 = scmp.eq.s32.totalorder %s23, 0
      %p92 = por %p90, %p91
      %s93 = ssub.s32 %s24, %s36
      %s94 = ssub.s32 %s25, %s32
      %s95 = sor.u32 %s93, %s94
      %p96 = scmp.eq.s32.totalorder %s95, 0
      %s98 = sadd.s32 %s97, 1
      %s99 = scalar_select %p96, %s97, %s98
      %p102 = pneg %p96
      %p103 = scmp.eq.s32.totalorder %s17, 1
      %p104 = por %p102, %p103
      %p105 = scmp.ne.s32.totalorder %s97, %s100
      %p106 = scmp.eq.s32.totalorder %s17, 0
      %p107 = por %p105, %p106
      %p108 = scmp.ne.s32.totalorder %s97, %s100
      %p109 = scmp.eq.s32.totalorder %s22, 1
      %p110 = por %p108, %p109
      %p111 = scmp.ne.s32.totalorder %s100, %s101
      %p112 = scmp.eq.s32.totalorder %s22, 0
      %p113 = por %p111, %p112
      %p114 = scmp.ne.s32.totalorder %s100, %s101
      %p115 = scmp.eq.s32.totalorder %s23, 1
      %p116 = por %p114, %p115
      %p118 = scmp.ne.s32.totalorder %s101, %s117
      %p119 = scmp.eq.s32.totalorder %s23, 0
      %p120 = por %p118, %p119
      %p121 = scmp.le.s32.totalorder 1, %s17
      %p122 = scmp.lt.s32.totalorder %s17, 3
      %p123 = pnand %p121, %p122
      %p124 = pneg %p123
      // Predicated region
      $region9: #{tpu_custom_call.1} parent=5 // pred_check
        _
      $region10: #{tpu_custom_call.1} parent=5 // pred_check_branch
        %126 = sbr.rel (%p123) target = $region12
      $region11: #{tpu_custom_call.1} parent=5 // pred_region
        %s127 = ssub.s32 %s17, 1
      $region12: #{tpu_custom_call.1} parent=5 // pred_fallthru
        _
      %p128 = scmp.lt.s32.totalorder %s17, 2
      // Predicated region
      $region13: #{tpu_custom_call.1} parent=5 // pred_check
        %p129 = pneg %p128
      $region14: #{tpu_custom_call.1} parent=5 // pred_check_branch
        %131 = sbr.rel (%p129) target = $region16
      $region15: #{tpu_custom_call.1} parent=5 // pred_region
        // Predicated region
        $region17: #{tpu_custom_call.1} parent=15 // pred_check
          %p132 = pneg %p51
        $region18: #{tpu_custom_call.1} parent=15 // pred_check_branch
          %134 = sbr.rel (%p132) target = $region20
        $region19: #{tpu_custom_call.1} parent=15 // pred_region
          %s135 = sand.u32 %s41, 1
          %s136 = scalar_lea.sflag [#allocation3], %s135
          %s137 = sand.u32 %s41, 1
          %s138 = smul.addr %s137, 32
          %s139 = scalar_lea.vmem [#allocation2], %s138
          %s140 = smul.u32 8, %s25
          %s142 = ssub.s32 512, 512
          %143 = vsyncadd %s136, %s142
          %s144 = smul.addr %s24, 8
          %s145 = sadd.s32 %s140, %s144
          %s146 = smul.addr %s145, 64
          %s147 = scalar_lea.hbm %s0, %s146
          %s148 = sshll.u32 %s139, 4
          %s149 = int_to_ptr.vmem [resolvable:$true] %s148
          %154 = dma.hbm_to_vmem [thread:$0]  %s147, 512, %s149, %s136, 64, 64, 4
        $region20: #{tpu_custom_call.1} parent=15 // pred_fallthru
          _
        // Predicated region
        $region21: #{tpu_custom_call.1} parent=15 // pred_check
          %p155 = pneg %p79
        $region22: #{tpu_custom_call.1} parent=15 // pred_check_branch
          %157 = sbr.rel (%p155) target = $region24
        $region23: #{tpu_custom_call.1} parent=15 // pred_region
          %s158 = sand.u32 %s69, 1
          %s159 = scalar_lea.sflag [#allocation6], %s158
          %s160 = sand.u32 %s69, 1
          %s161 = smul.addr %s160, 64
          %s162 = scalar_lea.vmem [#allocation5], %s161
          %s163 = smul.u32 8, %s25
          %s165 = ssub.s32 1024, 1024
          %166 = vsyncadd %s159, %s165
          %s167 = smul.addr %s24, 8
          %s168 = sadd.s32 %s163, %s167
          %s169 = smul.addr %s168, 128
          %s170 = scalar_lea.hbm %s1, %s169
          %s171 = sshll.u32 %s162, 4
          %s172 = int_to_ptr.vmem [resolvable:$true] %s171
          %177 = dma.hbm_to_vmem [thread:$0]  %s170, 1024, %s172, %s159, 128, 128, 8
        $region24: #{tpu_custom_call.1} parent=15 // pred_fallthru
          _
      $region16: #{tpu_custom_call.1} parent=5 // pred_fallthru
        _
      %p178 = scmp.le.s32.totalorder 1, %s17
      %p179 = scmp.lt.s32.totalorder %s17, 3
      %p180 = pnand %p178, %p179
      %p181 = pneg %p180
      // Predicated region
      $region25: #{tpu_custom_call.1} parent=5 // pred_check
        _
      $region26: #{tpu_custom_call.1} parent=5 // pred_check_branch
        %183 = sbr.rel (%p180) target = $region28
      $region27: #{tpu_custom_call.1} parent=5 // pred_region
        %s184 = ssub.s32 %s17, 1
        %s185 = sand.u32 %s44, 1
        %s186 = scalar_lea.sflag [#allocation3], %s185
        %s187 = sand.u32 %s44, 1
        %s188 = smul.addr %s187, 32
        %s189 = scalar_lea.vmem [#allocation2], %s188
        // Predicated region
        $region29: #{tpu_custom_call.1} parent=27 // pred_check
          %p190 = pneg %p57
        $region30: #{tpu_custom_call.1} parent=27 // pred_check_branch
          %192 = sbr.rel (%p190) target = $region32
        $region31: #{tpu_custom_call.1} parent=27 // pred_region
          %193 = dma.done %s186, 512
        $region32: #{tpu_custom_call.1} parent=27 // pred_fallthru
          _
        %s194 = sand.u32 %s72, 1
        %s195 = scalar_lea.sflag [#allocation6], %s194
        %s196 = sand.u32 %s72, 1
        %s197 = smul.addr %s196, 64
        %s198 = scalar_lea.vmem [#allocation5], %s197
        // Predicated region
        $region33: #{tpu_custom_call.1} parent=27 // pred_check
          %p199 = pneg %p85
        $region34: #{tpu_custom_call.1} parent=27 // pred_check_branch
          %201 = sbr.rel (%p199) target = $region36
        $region35: #{tpu_custom_call.1} parent=27 // pred_region
          %202 = dma.done %s195, 1024
        $region36: #{tpu_custom_call.1} parent=27 // pred_fallthru
          _
        %s203 = sand.u32 %s44, 1
        %s204 = scalar_lea.sflag [#allocation3], %s203
        %s205 = sand.u32 %s44, 1
        %s206 = smul.addr %s205, 32
        %s207 = scalar_lea.vmem [#allocation2], %s206
        %p208 = pneg %p57
        %p209 = pneg %p54
        %s210 = sand.u32 %s72, 1
        %s211 = scalar_lea.sflag [#allocation6], %s210
        %s212 = sand.u32 %s72, 1
        %s213 = smul.addr %s212, 64
        %s214 = scalar_lea.vmem [#allocation5], %s213
        %p215 = pneg %p85
        %p216 = pneg %p82
        %p217 = pneg %p113
        %p218 = pneg %p110
        %s219 = sand.u32 %s100, 1
        %s220 = scalar_lea.sflag [#allocation4], %s219
        %s221 = sand.u32 %s100, 1
        %s222 = smul.addr %s221, 128
        %s223 = scalar_lea.vmem [#allocation7], %s222
        %s224 = smul.u32 8, %s27
        %s225 = smul.u32 8, %s27
        %s226 = smul.u32 8, %s27
        %v228 = vld [vmem:[%s189] sm:$0xf]
        %v229 = vld [vmem:[%s189 + $0x4] sm:$0xf]
        %v230 = vld [vmem:[%s189 + $0x8] sm:$0xf]
        %v231 = vld [vmem:[%s189 + $0xc] sm:$0xf]
        %v232 = vld [vmem:[%s189 + $0x10] sm:$0xf]
        %v233 = vld [vmem:[%s189 + $0x14] sm:$0xf]
        %v234 = vld [vmem:[%s189 + $0x18] sm:$0xf]
        %v235 = vld [vmem:[%s189 + $0x1c] sm:$0xf]
        %v236 = vld [vmem:[%s198] sm:$0xff]
        %v237 = vld [vmem:[%s198 + $0x8] sm:$0xff]
        %v238 = vld [vmem:[%s198 + $0x10] sm:$0xff]
        %v239 = vld [vmem:[%s198 + $0x18] sm:$0xff]
        %v240 = vld [vmem:[%s198 + $0x20] sm:$0xff]
        %v241 = vld [vmem:[%s198 + $0x28] sm:$0xff]
        %v242 = vld [vmem:[%s198 + $0x30] sm:$0xff]
        %v243 = vld [vmem:[%s198 + $0x38] sm:$0xff]
        %s244 = smul.u32 %s27, 8
        %v245 = vstv %s244
        %v246 = vadd.s32 %v245, 1
        %v247 = vadd.s32 %v245, 2
        %v248 = vadd.s32 %v245, 3
        %v249 = vadd.s32 %v245, 4
        %v250 = vadd.s32 %v245, 5
        %v251 = vadd.s32 %v245, 6
        %v252 = vadd.s32 %v245, 7
        %v253 = vlaneseq
        %v254 = vshrl.u32 %v253, 7
        %v255 = vmul.u32 %v245, 2
        %v256 = vmul.u32 %v246, 2
        %v257 = vmul.u32 %v247, 2
        %v258 = vmul.u32 %v248, 2
        %v259 = vmul.u32 %v249, 2
        %v260 = vmul.u32 %v250, 2
        %v261 = vmul.u32 %v251, 2
        %v262 = vmul.u32 %v252, 2
        %v263 = vmul.u32 %v255, 16
        %v264 = vmul.u32 %v256, 16
        %v265 = vmul.u32 %v257, 16
        %v266 = vmul.u32 %v258, 16
        %v267 = vmul.u32 %v259, 16
        %v268 = vmul.u32 %v260, 16
        %v269 = vmul.u32 %v261, 16
        %v270 = vmul.u32 %v262, 16
        %v271 = vmul.u32 %v254, 2
        %v272 = vadd.s32 %v263, %v271
        %v273 = vadd.s32 %v264, %v271
        %v274 = vadd.s32 %v265, %v271
        %v275 = vadd.s32 %v266, %v271
        %v276 = vadd.s32 %v267, %v271
        %v277 = vadd.s32 %v268, %v271
        %v278 = vadd.s32 %v269, %v271
        %v279 = vadd.s32 %v270, %v271
        %v280 = vsub.s32 %v236, %v272
        %v281 = vsub.s32 %v237, %v273
        %v282 = vsub.s32 %v238, %v274
        %v283 = vsub.s32 %v239, %v275
        %v284 = vsub.s32 %v240, %v276
        %v285 = vsub.s32 %v241, %v277
        %v286 = vsub.s32 %v242, %v278
        %v287 = vsub.s32 %v243, %v279
        %vm288 = vcmp.eq.s32.totalorder %v280, 0
        %vm289 = vcmp.eq.s32.totalorder %v281, 0
        %vm290 = vcmp.eq.s32.totalorder %v282, 0
        %vm291 = vcmp.eq.s32.totalorder %v283, 0
        %vm292 = vcmp.eq.s32.totalorder %v284, 0
        %vm293 = vcmp.eq.s32.totalorder %v285, 0
        %vm294 = vcmp.eq.s32.totalorder %v286, 0
        %vm295 = vcmp.eq.s32.totalorder %v287, 0
        %vm296 = vmpackc.low %vm288, %vm288
        %vm297 = vmpackc.low %vm289, %vm289
        %vm298 = vmpackc.low %vm290, %vm290
        %vm299 = vmpackc.low %vm291, %vm291
        %vm300 = vmpackc.low %vm292, %vm292
        %vm301 = vmpackc.low %vm293, %vm293
        %vm302 = vmpackc.low %vm294, %vm294
        %vm303 = vmpackc.low %vm295, %vm295
        %v304 = vsel %vm296, %v228, 0
        %v305 = vsel %vm297, %v229, 0
        %v306 = vsel %vm298, %v230, 0
        %v307 = vsel %vm299, %v231, 0
        %v308 = vsel %vm300, %v232, 0
        %v309 = vsel %vm301, %v233, 0
        %v310 = vsel %vm302, %v234, 0
        %v311 = vsel %vm303, %v235, 0
        %312 = vst [vmem:[%s223] sm:$0xf] %v304
        %313 = vst [vmem:[%s223 + $0x10] sm:$0xf] %v305
        %314 = vst [vmem:[%s223 + $0x20] sm:$0xf] %v306
        %315 = vst [vmem:[%s223 + $0x30] sm:$0xf] %v307
        %316 = vst [vmem:[%s223 + $0x40] sm:$0xf] %v308
        %317 = vst [vmem:[%s223 + $0x50] sm:$0xf] %v309
        %318 = vst [vmem:[%s223 + $0x60] sm:$0xf] %v310
        %319 = vst [vmem:[%s223 + $0x70] sm:$0xf] %v311
        %vm320 = vcmp.eq.s32.totalorder %v280, 1
        %vm321 = vcmp.eq.s32.totalorder %v281, 1
        %vm322 = vcmp.eq.s32.totalorder %v282, 1
        %vm323 = vcmp.eq.s32.totalorder %v283, 1
        %vm324 = vcmp.eq.s32.totalorder %v284, 1
        %vm325 = vcmp.eq.s32.totalorder %v285, 1
        %vm326 = vcmp.eq.s32.totalorder %v286, 1
        %vm327 = vcmp.eq.s32.totalorder %v287, 1
        %vm328 = vmpackc.low %vm320, %vm320
        %vm329 = vmpackc.low %vm321, %vm321
        %vm330 = vmpackc.low %vm322, %vm322
        %vm331 = vmpackc.low %vm323, %vm323
        %vm332 = vmpackc.low %vm324, %vm324
        %vm333 = vmpackc.low %vm325, %vm325
        %vm334 = vmpackc.low %vm326, %vm326
        %vm335 = vmpackc.low %vm327, %vm327
        %v336 = vsel %vm328, %v228, 0
        %v337 = vsel %vm329, %v229, 0
        %v338 = vsel %vm330, %v230, 0
        %v339 = vsel %vm331, %v231, 0
        %v340 = vsel %vm332, %v232, 0
        %v341 = vsel %vm333, %v233, 0
        %v342 = vsel %vm334, %v234, 0
        %v343 = vsel %vm335, %v235, 0
        %344 = vst [vmem:[%s223 + $0x4] sm:$0xf] %v336
        %345 = vst [vmem:[%s223 + $0x14] sm:$0xf] %v337
        %346 = vst [vmem:[%s223 + $0x24] sm:$0xf] %v338
        %347 = vst [vmem:[%s223 + $0x34] sm:$0xf] %v339
        %348 = vst [vmem:[%s223 + $0x44] sm:$0xf] %v340
        %349 = vst [vmem:[%s223 + $0x54] sm:$0xf] %v341
        %350 = vst [vmem:[%s223 + $0x64] sm:$0xf] %v342
        %351 = vst [vmem:[%s223 + $0x74] sm:$0xf] %v343
        %vm352 = vcmp.eq.s32.totalorder %v280, 16
        %vm353 = vcmp.eq.s32.totalorder %v281, 16
        %vm354 = vcmp.eq.s32.totalorder %v282, 16
        %vm355 = vcmp.eq.s32.totalorder %v283, 16
        %vm356 = vcmp.eq.s32.totalorder %v284, 16
        %vm357 = vcmp.eq.s32.totalorder %v285, 16
        %vm358 = vcmp.eq.s32.totalorder %v286, 16
        %vm359 = vcmp.eq.s32.totalorder %v287, 16
        %vm360 = vmpackc.low %vm352, %vm352
        %vm361 = vmpackc.low %vm353, %vm353
        %vm362 = vmpackc.low %vm354, %vm354
        %vm363 = vmpackc.low %vm355, %vm355
        %vm364 = vmpackc.low %vm356, %vm356
        %vm365 = vmpackc.low %vm357, %vm357
        %vm366 = vmpackc.low %vm358, %vm358
        %vm367 = vmpackc.low %vm359, %vm359
        %v368 = vsel %vm360, %v228, 0
        %v369 = vsel %vm361, %v229, 0
        %v370 = vsel %vm362, %v230, 0
        %v371 = vsel %vm363, %v231, 0
        %v372 = vsel %vm364, %v232, 0
        %v373 = vsel %vm365, %v233, 0
        %v374 = vsel %vm366, %v234, 0
        %v375 = vsel %vm367, %v235, 0
        %s376 = scalar_lea.vmem %s223, 8 [#allocation7]
        %377 = vst [vmem:[%s376] sm:$0xf] %v368
        %378 = vst [vmem:[%s376 + $0x10] sm:$0xf] %v369
        %379 = vst [vmem:[%s376 + $0x20] sm:$0xf] %v370
        %380 = vst [vmem:[%s376 + $0x30] sm:$0xf] %v371
        %381 = vst [vmem:[%s376 + $0x40] sm:$0xf] %v372
        %382 = vst [vmem:[%s376 + $0x50] sm:$0xf] %v373
        %383 = vst [vmem:[%s376 + $0x60] sm:$0xf] %v374
        %384 = vst [vmem:[%s376 + $0x70] sm:$0xf] %v375
        %vm385 = vcmp.eq.s32.totalorder %v280, 17
        %vm386 = vcmp.eq.s32.totalorder %v281, 17
        %vm387 = vcmp.eq.s32.totalorder %v282, 17
        %vm388 = vcmp.eq.s32.totalorder %v283, 17
        %vm389 = vcmp.eq.s32.totalorder %v284, 17
        %vm390 = vcmp.eq.s32.totalorder %v285, 17
        %vm391 = vcmp.eq.s32.totalorder %v286, 17
        %vm392 = vcmp.eq.s32.totalorder %v287, 17
        %vm393 = vmpackc.low %vm385, %vm385
        %vm394 = vmpackc.low %vm386, %vm386
        %vm395 = vmpackc.low %vm387, %vm387
        %vm396 = vmpackc.low %vm388, %vm388
        %vm397 = vmpackc.low %vm389, %vm389
        %vm398 = vmpackc.low %vm390, %vm390
        %vm399 = vmpackc.low %vm391, %vm391
        %vm400 = vmpackc.low %vm392, %vm392
        %v401 = vsel %vm393, %v228, 0
        %v402 = vsel %vm394, %v229, 0
        %v403 = vsel %vm395, %v230, 0
        %v404 = vsel %vm396, %v231, 0
        %v405 = vsel %vm397, %v232, 0
        %v406 = vsel %vm398, %v233, 0
        %v407 = vsel %vm399, %v234, 0
        %v408 = vsel %vm400, %v235, 0
        %409 = vst [vmem:[%s376 + $0x4] sm:$0xf] %v401
        %410 = vst [vmem:[%s376 + $0x14] sm:$0xf] %v402
        %411 = vst [vmem:[%s376 + $0x24] sm:$0xf] %v403
        %412 = vst [vmem:[%s376 + $0x34] sm:$0xf] %v404
        %413 = vst [vmem:[%s376 + $0x44] sm:$0xf] %v405
        %414 = vst [vmem:[%s376 + $0x54] sm:$0xf] %v406
        %415 = vst [vmem:[%s376 + $0x64] sm:$0xf] %v407
        %416 = vst [vmem:[%s376 + $0x74] sm:$0xf] %v408
        %s417 = sand.u32 %s100, 1
        %s418 = scalar_lea.sflag [#allocation4], %s417
        %s419 = sand.u32 %s100, 1
        %s420 = smul.addr %s419, 128
        %s421 = scalar_lea.vmem [#allocation7], %s420
        // Predicated region
        $region37: #{tpu_custom_call.1} parent=27 // pred_check
          %p422 = pneg %p110
        $region38: #{tpu_custom_call.1} parent=27 // pred_check_branch
          %424 = sbr.rel (%p422) target = $region40
        $region39: #{tpu_custom_call.1} parent=27 // pred_region
          %s425 = smul.u32 8, %s27
          %s427 = ssub.s32 2048, 2048
          %428 = vsyncadd %s418, %s427
          %s429 = smul.addr %s425, 4
          %s430 = smul.addr %s26, 32
          %s431 = sadd.s32 %s429, %s430
          %s432 = smul.addr %s431, 64
          %s433 = scalar_lea.hbm %s2, %s432
          %s434 = sshll.u32 %s421, 4
          %s435 = int_to_ptr.vmem [resolvable:$true] %s434
          %440 = dma.vmem_to_hbm [thread:$0]  %s435, 2048, %s433, %s418, 128, 128, 8
        $region40: #{tpu_custom_call.1} parent=27 // pred_fallthru
          _
      $region28: #{tpu_custom_call.1} parent=5 // pred_fallthru
        _
      %p441 = scmp.le.s32.totalorder 2, %s17
      // Predicated region
      $region41: #{tpu_custom_call.1} parent=5 // pred_check
        %p442 = pneg %p441
      $region42: #{tpu_custom_call.1} parent=5 // pred_check_branch
        %444 = sbr.rel (%p442) target = $region44
      $region43: #{tpu_custom_call.1} parent=5 // pred_region
        %s445 = ssub.s32 %s17, 2
        // Predicated region
        $region45: #{tpu_custom_call.1} parent=43 // pred_check
          %p446 = pneg %p116
        $region46: #{tpu_custom_call.1} parent=43 // pred_check_branch
          %448 = sbr.rel (%p446) target = $region48
        $region47: #{tpu_custom_call.1} parent=43 // pred_region
          %s449 = sand.u32 %s101, 1
          %s450 = scalar_lea.sflag [#allocation4], %s449
          %s451 = sand.u32 %s101, 1
          %s452 = smul.addr %s451, 128
          %s453 = scalar_lea.vmem [#allocation7], %s452
          %454 = dma.done %s450, 2048
        $region48: #{tpu_custom_call.1} parent=43 // pred_fallthru
          _
      $region44: #{tpu_custom_call.1} parent=5 // pred_fallthru
        _
    $region6: #{tpu_custom_call.1} parent=1 // loop_footer
      %s21 = sadd.s32 1, %s17
    $region7: #{tpu_custom_call.1} parent=1 // loop_footer_branch
      %16 = sbr.rel target = $region3
    $region8: #{tpu_custom_call.1} parent=1 // loop_exit
      _
    %455 = vsyncpa [#allocation3], 1
    %s456 = scalar_lea.sflag [#allocation3], 1
    %457 = vsyncpa %s456, 1
    %458 = vsyncpa [#allocation6], 1
    %s459 = scalar_lea.sflag [#allocation6], 1
    %460 = vsyncpa %s459, 1
    %461 = vsyncpa [#allocation4], 1
    %s462 = scalar_lea.sflag [#allocation4], 1
    %463 = vsyncpa %s462, 1

</llo_original>
